<compile_context>
chip_gen: v5e
topology: v5e:2x2
jax: 0.10.0
libtpu: 0.0.40
codegen_flags: <defaults>
</compile_context>

<pallas_src>
import jax
import jax.numpy as jnp
from jax import lax
from jax.experimental import pallas as pl
from jax.experimental.pallas import tpu as pltpu


def _hawkes_kernel(q_ref, ctx_ref, ae_ref, ab_ref,
                   w_in_ref, w_mix_ref, w_q_ref,
                   slab_ref):
    f32 = jnp.float32
    q = q_ref[...].astype(f32)          # (TB, D)
    ctx = ctx_ref[...].astype(f32)      # (TB, Q, D)
    ae = ae_ref[...].astype(f32)        # (TB, 1)
    ab = ab_ref[...].astype(f32)        # (TB, 1)
    Qn = ctx.shape[1]
    D = ctx.shape[2]

    # linear_in (no bias):  q_lin = q @ W_in^T  (W_in^T passed pre-transposed)
    q_lin = jnp.dot(q, w_in_ref[...].astype(f32), preferred_element_type=f32)  # (TB, D)

    # attention scores + softmax, kept in (TB, Q, 1) layout so the weights can
    # be reused directly against ctx without a lane<->sublane round trip.
    scores = jnp.sum(q_lin[:, None, :] * ctx, axis=-1, keepdims=True)          # (TB, Q, 1)
    m = jnp.max(scores, axis=1, keepdims=True)                                 # (TB, 1, 1)
    e = jnp.exp(scores - m)
    aw = e / jnp.sum(e, axis=1, keepdims=True)                                 # (TB, Q, 1)

    # Hawkes mixing. PyTorch keeps mix as (B, D, Q); we keep the transposed
    # (TB, Q, D) orientation — the reduction over Q is identical.
    mix = aw * ctx                                                             # (TB, Q, D)

    # decay factor at (TB, Q, 1):  factor[b, q] = ae[b] * exp(-ab[b] * (Q-1-q))
    # (exp issued TB*Q times, not TB*Q*D)
    delta_t = (Qn - 1) - lax.broadcasted_iota(jnp.int32, (1, Qn, 1), 1).astype(f32)
    factor = ae[:, :, None] * jnp.exp(-ab[:, :, None] * delta_t)               # (TB, Q, 1)

    # mix_sum = sum_q( relu(factor * mix) + mix )  — no separate bt/term_2 temps
    mix_sum = jnp.sum(jnp.maximum(factor * mix, 0.0) + mix, axis=1)            # (TB, D)

    # linear_out over cat([mix_sum, q_lin], -1)  ==  mix_sum @ W_mix + q_lin @ W_q
    out = jnp.tanh(
        jnp.dot(mix_sum, w_mix_ref[...].astype(f32), preferred_element_type=f32)
        + jnp.dot(q_lin, w_q_ref[...].astype(f32), preferred_element_type=f32))  # (TB, D)

    # one lane-dense (TB, D+Q) output slab: [ output | attention weights ]
    slab_ref[:, :D] = out.astype(slab_ref.dtype)
    slab_ref[:, D:] = aw[:, :, 0].astype(slab_ref.dtype)


def _pick_batch_tile(B, Q, D, ctx_bytes, q_bytes):
    """Batch-tile size derived from a conservative VMEM budget."""
    # per-row bytes: ctx double-buffer + ~3 live (Q, D) f32 temps + q/out/slab blocks
    per_row = (Q * D * (2 * ctx_bytes + 3 * 4)
               + D * (2 * q_bytes + 4 * 4) + Q * 4 * 4 + 64)
    budget = 32 * 1024 * 1024          # tiles+temps target; fits v7x's 64 MiB VMEM
    tb = max(8, min(budget // per_row, 1024))
    tb = int(tb) // 8 * 8
    if B <= 8:
        return B                       # single block; block dim == full dim is legal
    if B <= tb:
        # split into >= 2 grid steps so dimension_semantics=("parallel",) can
        # shard the batch across both v7x TensorCores (no cost on v5e/v6e).
        half = -(-B // 2)
        return min(tb, ((half + 7) // 8) * 8)
    return tb


def hawkes_attention(query, context, index, w_in, w_out, ae, ab):
    """query: (B, 1, D)  context: (B, Q, D)  index: (B,) int32
    w_in: (D, D)  w_out: (D, 2D)  ae/ab: (num_stocks, 1, 1)."""
    B, L, D = query.shape
    Q = context.shape[1]
    assert L == 1, "Hawkes_Attention broadcast/cat semantics require output_len == 1"

    # Glue in plain JAX: gather per-batch Hawkes scalars, pre-transpose / split
    # the output weights.  Inputs are NOT astype'd here (no extra HBM pass);
    # the kernel casts once after load.
    ae_sel = ae[index].reshape(B, 1)
    ab_sel = ab[index].reshape(B, 1)
    q2 = query.reshape(B, D)
    w_in_t = jnp.transpose(w_in)            # (D, D)   y = x @ w_in_t
    w_mix_t = jnp.transpose(w_out[:, :D])   # (D, D)   acts on the mix half
    w_q_t = jnp.transpose(w_out[:, D:])     # (D, D)   acts on the query half

    TB = _pick_batch_tile(B, Q, D, context.dtype.itemsize, q2.dtype.itemsize)
    grid = (pl.cdiv(B, TB),)
    # NOTE: when B % TB != 0 the padded rows of the last block compute on
    # undefined VMEM; their results are masked off at writeback (correct).

    slab = pl.pallas_call(
        _hawkes_kernel,
        out_shape=jax.ShapeDtypeStruct((B, D + Q), query.dtype),
        grid=grid,
        in_specs=[
            pl.BlockSpec((TB, D), lambda i: (i, 0)),        # query (squeezed L)
            pl.BlockSpec((TB, Q, D), lambda i: (i, 0, 0)),  # context
            pl.BlockSpec((TB, 1), lambda i: (i, 0)),        # ae (per row)
            pl.BlockSpec((TB, 1), lambda i: (i, 0)),        # ab (per row)
            pl.BlockSpec((D, D), lambda i: (0, 0)),         # w_in_t
            pl.BlockSpec((D, D), lambda i: (0, 0)),         # w_mix_t
            pl.BlockSpec((D, D), lambda i: (0, 0)),         # w_q_t
        ],
        out_specs=pl.BlockSpec((TB, D + Q), lambda i: (i, 0)),
        compiler_params=pltpu.CompilerParams(
            dimension_semantics=("parallel",),
            vmem_limit_bytes=48 * 1024 * 1024),
    )(q2, context, ae_sel, ab_sel, w_in_t, w_mix_t, w_q_t)

    out = slab[:, :D].reshape(B, L, D)
    aw = slab[:, D:].reshape(B, L, Q)
    return out, aw


def hawkes_attention_ref(query, context, index, w_in, w_out, ae, ab):
    """Pure-JAX reference mirroring the PyTorch forward."""
    B, L, D = query.shape
    Q = context.shape[1]
    ae_b = ae[index]                    # (B, 1, 1)
    ab_b = ab[index]
    q = (query.reshape(B * L, D) @ w_in.T).reshape(B, L, D)
    scores = jnp.einsum('bld,bqd->blq', q, context)
    aw = jax.nn.softmax(scores, axis=-1)
    mix = aw * jnp.transpose(context, (0, 2, 1))                 # (B, D, Q)
    delta = jnp.arange(Q - 1, -1, -1, dtype=jnp.float32).reshape(1, 1, Q)
    bt = jnp.exp(-ab_b * delta)
    term_2 = jax.nn.relu(ae_b * mix * bt)
    mix_s = jnp.sum(term_2 + mix, axis=-1)[:, None, :]           # (B, 1, D)
    combined = jnp.concatenate([mix_s, q], axis=2).reshape(B * L, 2 * D)
    out = jnp.tanh(combined @ w_out.T).reshape(B, L, D)
    return out, aw


if __name__ == "__main__":
    B, L, D, Q = 2, 1, 32, 8
    NUM_STOCKS = 4

    key = jax.random.PRNGKey(0)
    k_q, k_c, k_wi, k_wo, k_ae, k_ab = jax.random.split(key, 6)

    query = jax.random.normal(k_q, (B, L, D), dtype=jnp.float32)
    context = jax.random.normal(k_c, (B, Q, D), dtype=jnp.float32)
    index = jnp.array([1, 3], dtype=jnp.int32)

    # deterministic parameter init (shapes from the module __init__)
    lim_in = 1.0 / jnp.sqrt(D)
    lim_out = 1.0 / jnp.sqrt(2 * D)
    w_in = jax.random.uniform(k_wi, (D, D), jnp.float32, -lim_in, lim_in)         # Linear(D, D)
    w_out = jax.random.uniform(k_wo, (D, 2 * D), jnp.float32, -lim_out, lim_out)  # Linear(2D, D)
    ae = jax.random.uniform(k_ae, (NUM_STOCKS, 1, 1), jnp.float32, -0.1, 0.1)
    ab = jax.random.uniform(k_ab, (NUM_STOCKS, 1, 1), jnp.float32, -0.1, 0.1)

    out, aw = hawkes_attention(query, context, index, w_in, w_out, ae, ab)
    jax.block_until_ready((out, aw))

    out_ref, aw_ref = hawkes_attention_ref(query, context, index, w_in, w_out, ae, ab)
    assert jnp.allclose(out, out_ref, atol=1e-5, rtol=1e-5), "output mismatch"
    assert jnp.allclose(aw, aw_ref, atol=1e-5, rtol=1e-5), "attention weights mismatch"

    print("KERNEL_OK")
</pallas_src>

<mosaic_0001>
module attributes {stable_mosaic.version = 11 : i64} {
  func.func @_hawkes_kernel(%arg0: i32, %arg1: memref<2x32xf32, #tpu.memory_space<vmem>>, %arg2: memref<2x8x32xf32, #tpu.memory_space<vmem>>, %arg3: memref<2x1xf32, #tpu.memory_space<vmem>>, %arg4: memref<2x1xf32, #tpu.memory_space<vmem>>, %arg5: memref<32x32xf32, #tpu.memory_space<vmem>>, %arg6: memref<32x32xf32, #tpu.memory_space<vmem>>, %arg7: memref<32x32xf32, #tpu.memory_space<vmem>>, %arg8: memref<2x40xf32, #tpu.memory_space<vmem>>) attributes {dimension_semantics = [#tpu.dimension_semantics<parallel>], iteration_bounds = array<i64: 1>, scalar_prefetch = 0 : i64, scratch_operands = 0 : i64, tpu.core_type = #tpu.core_type<tc>, window_params = [{transform_indices = @transform_0, window_bounds = array<i64: 2, 32>}, {transform_indices = @transform_1, window_bounds = array<i64: 2, 8, 32>}, {transform_indices = @transform_2, window_bounds = array<i64: 2, 1>}, {transform_indices = @transform_3, window_bounds = array<i64: 2, 1>}, {pipeline_mode = #tpu.pipeline_mode<synchronous>, transform_indices = @transform_4, window_bounds = array<i64: 32, 32>}, {pipeline_mode = #tpu.pipeline_mode<synchronous>, transform_indices = @transform_5, window_bounds = array<i64: 32, 32>}, {pipeline_mode = #tpu.pipeline_mode<synchronous>, transform_indices = @transform_6, window_bounds = array<i64: 32, 32>}, {transform_indices = @transform_7, window_bounds = array<i64: 2, 40>}]} {
    %c0 = arith.constant 0 : index
    %c0_0 = arith.constant 0 : index
    %0 = vector.load %arg1[%c0, %c0_0] : memref<2x32xf32, #tpu.memory_space<vmem>>, vector<2x32xf32>
    %c0_1 = arith.constant 0 : index
    %c0_2 = arith.constant 0 : index
    %c0_3 = arith.constant 0 : index
    %1 = vector.load %arg2[%c0_1, %c0_2, %c0_3] : memref<2x8x32xf32, #tpu.memory_space<vmem>>, vector<2x8x32xf32>
    %c0_4 = arith.constant 0 : index
    %c0_5 = arith.constant 0 : index
    %2 = vector.load %arg3[%c0_4, %c0_5] : memref<2x1xf32, #tpu.memory_space<vmem>>, vector<2x1xf32>
    %c0_6 = arith.constant 0 : index
    %c0_7 = arith.constant 0 : index
    %3 = vector.load %arg4[%c0_6, %c0_7] : memref<2x1xf32, #tpu.memory_space<vmem>>, vector<2x1xf32>
    %c0_8 = arith.constant 0 : index
    %c0_9 = arith.constant 0 : index
    %4 = vector.load %arg5[%c0_8, %c0_9] : memref<32x32xf32, #tpu.memory_space<vmem>>, vector<32x32xf32>
    %cst = arith.constant dense<0.000000e+00> : vector<2x32xf32>
    %5 = tpu.matmul %0, %4, %cst {dimension_numbers = #tpu.dot_dimension_numbers<[1], [0], [0], [1], [0, 0, 1, 1], [], []>} : vector<2x32xf32>, vector<32x32xf32>, vector<2x32xf32> -> vector<2x32xf32>
    %6 = vector.shape_cast %5 : vector<2x32xf32> to vector<2x1x32xf32>
    %7 = vector.broadcast %6 : vector<2x1x32xf32> to vector<2x8x32xf32>
    %8 = arith.mulf %7, %1 : vector<2x8x32xf32>
    %cst_10 = arith.constant dense<0.000000e+00> : vector<2x8xf32>
    %9 = vector.multi_reduction <add>, %8, %cst_10 [2] : vector<2x8x32xf32> to vector<2x8xf32>
    %10 = vector.shape_cast %9 : vector<2x8xf32> to vector<2x8x1xf32>
    %cst_11 = arith.constant dense<0xFF800000> : vector<2x1xf32>
    %11 = vector.multi_reduction <maximumf>, %10, %cst_11 [1] : vector<2x8x1xf32> to vector<2x1xf32>
    %12 = vector.shape_cast %11 : vector<2x1xf32> to vector<2x1x1xf32>
    %13 = vector.broadcast %12 : vector<2x1x1xf32> to vector<2x8x1xf32>
    %14 = arith.subf %10, %13 : vector<2x8x1xf32>
    %15 = math.exp %14 : vector<2x8x1xf32>
    %cst_12 = arith.constant dense<0.000000e+00> : vector<2x1xf32>
    %16 = vector.multi_reduction <add>, %15, %cst_12 [1] : vector<2x8x1xf32> to vector<2x1xf32>
    %17 = vector.shape_cast %16 : vector<2x1xf32> to vector<2x1x1xf32>
    %18 = vector.broadcast %17 : vector<2x1x1xf32> to vector<2x8x1xf32>
    %19 = arith.divf %15, %18 : vector<2x8x1xf32>
    %20 = vector.broadcast %19 : vector<2x8x1xf32> to vector<2x8x32xf32>
    %21 = arith.mulf %20, %1 : vector<2x8x32xf32>
    %22 = tpu.iota {dimensions = array<i32: 1>} : vector<1x8x1xi32>
    %23 = arith.sitofp %22 : vector<1x8x1xi32> to vector<1x8x1xf32>
    %cst_13 = arith.constant 7.000000e+00 : f32
    %24 = vector.broadcast %cst_13 : f32 to vector<1x8x1xf32>
    %25 = arith.subf %24, %23 : vector<1x8x1xf32>
    %26 = vector.shape_cast %2 : vector<2x1xf32> to vector<2x1x1xf32>
    %27 = vector.shape_cast %3 : vector<2x1xf32> to vector<2x1x1xf32>
    %cst_14 = arith.constant 0.000000e+00 : f32
    %28 = vector.broadcast %cst_14 : f32 to vector<2x1x1xf32>
    %29 = arith.subf %28, %27 : vector<2x1x1xf32>
    %30 = vector.broadcast %29 : vector<2x1x1xf32> to vector<2x8x1xf32>
    %31 = vector.broadcast %25 : vector<1x8x1xf32> to vector<2x8x1xf32>
    %32 = arith.mulf %30, %31 : vector<2x8x1xf32>
    %33 = math.exp %32 : vector<2x8x1xf32>
    %34 = vector.broadcast %26 : vector<2x1x1xf32> to vector<2x8x1xf32>
    %35 = arith.mulf %34, %33 : vector<2x8x1xf32>
    %36 = vector.broadcast %35 : vector<2x8x1xf32> to vector<2x8x32xf32>
    %37 = arith.mulf %36, %21 : vector<2x8x32xf32>
    %cst_15 = arith.constant 0.000000e+00 : f32
    %38 = vector.broadcast %cst_15 : f32 to vector<2x8x32xf32>
    %39 = arith.maximumf %37, %38 : vector<2x8x32xf32>
    %40 = arith.addf %39, %21 : vector<2x8x32xf32>
    %cst_16 = arith.constant dense<0.000000e+00> : vector<2x32xf32>
    %41 = vector.multi_reduction <add>, %40, %cst_16 [1] : vector<2x8x32xf32> to vector<2x32xf32>
    %c0_17 = arith.constant 0 : index
    %c0_18 = arith.constant 0 : index
    %42 = vector.load %arg6[%c0_17, %c0_18] : memref<32x32xf32, #tpu.memory_space<vmem>>, vector<32x32xf32>
    %cst_19 = arith.constant dense<0.000000e+00> : vector<2x32xf32>
    %43 = tpu.matmul %41, %42, %cst_19 {dimension_numbers = #tpu.dot_dimension_numbers<[1], [0], [0], [1], [0, 0, 1, 1], [], []>} : vector<2x32xf32>, vector<32x32xf32>, vector<2x32xf32> -> vector<2x32xf32>
    %c0_20 = arith.constant 0 : index
    %c0_21 = arith.constant 0 : index
    %44 = vector.load %arg7[%c0_20, %c0_21] : memref<32x32xf32, #tpu.memory_space<vmem>>, vector<32x32xf32>
    %cst_22 = arith.constant dense<0.000000e+00> : vector<2x32xf32>
    %45 = tpu.matmul %5, %44, %cst_22 {dimension_numbers = #tpu.dot_dimension_numbers<[1], [0], [0], [1], [0, 0, 1, 1], [], []>} : vector<2x32xf32>, vector<32x32xf32>, vector<2x32xf32> -> vector<2x32xf32>
    %46 = arith.addf %43, %45 : vector<2x32xf32>
    %47 = math.tanh %46 : vector<2x32xf32>
    %c0_23 = arith.constant 0 : index
    %c0_24 = arith.constant 0 : index
    %48 = vector.load %arg8[%c0_23, %c0_24] : memref<2x40xf32, #tpu.memory_space<vmem>>, vector<2x32xf32>
    tpu.vector_store %arg8[%c0_23, %c0_24], %47 {strides = array<i32>} : memref<2x40xf32, #tpu.memory_space<vmem>>, vector<2x32xf32>,
    %49 = vector.shape_cast %19 : vector<2x8x1xf32> to vector<2x8xf32>
    %c0_25 = arith.constant 0 : index
    %c32 = arith.constant 32 : index
    %50 = vector.load %arg8[%c0_25, %c32] : memref<2x40xf32, #tpu.memory_space<vmem>>, vector<2x8xf32>
    tpu.vector_store %arg8[%c0_25, %c32], %49 {strides = array<i32>} : memref<2x40xf32, #tpu.memory_space<vmem>>, vector<2x8xf32>,
    return
  }
  func.func @transform_0(%arg0: i32) -> (i32, i32) {
    %c0_i32 = arith.constant 0 : i32
    %c0_i32_0 = arith.constant 0 : i32
    return %arg0, %c0_i32 : i32, i32
  }
  func.func @transform_1(%arg0: i32) -> (i32, i32, i32) {
    %c0_i32 = arith.constant 0 : i32
    %c0_i32_0 = arith.constant 0 : i32
    %c0_i32_1 = arith.constant 0 : i32
    return %arg0, %c0_i32, %c0_i32_0 : i32, i32, i32
  }
  func.func @transform_2(%arg0: i32) -> (i32, i32) {
    %c0_i32 = arith.constant 0 : i32
    %c0_i32_0 = arith.constant 0 : i32
    return %arg0, %c0_i32 : i32, i32
  }
  func.func @transform_3(%arg0: i32) -> (i32, i32) {
    %c0_i32 = arith.constant 0 : i32
    %c0_i32_0 = arith.constant 0 : i32
    return %arg0, %c0_i32 : i32, i32
  }
  func.func @transform_4(%arg0: i32) -> (i32, i32) {
    %c0_i32 = arith.constant 0 : i32
    %c0_i32_0 = arith.constant 0 : i32
    %c0_i32_1 = arith.constant 0 : i32
    return %c0_i32, %c0_i32_0 : i32, i32
  }
  func.func @transform_5(%arg0: i32) -> (i32, i32) {
    %c0_i32 = arith.constant 0 : i32
    %c0_i32_0 = arith.constant 0 : i32
    %c0_i32_1 = arith.constant 0 : i32
    return %c0_i32, %c0_i32_0 : i32, i32
  }
  func.func @transform_6(%arg0: i32) -> (i32, i32) {
    %c0_i32 = arith.constant 0 : i32
    %c0_i32_0 = arith.constant 0 : i32
    %c0_i32_1 = arith.constant 0 : i32
    return %c0_i32, %c0_i32_0 : i32, i32
  }
  func.func @transform_7(%arg0: i32) -> (i32, i32) {
    %c0_i32 = arith.constant 0 : i32
    %c0_i32_0 = arith.constant 0 : i32
    return %arg0, %c0_i32 : i32, i32
  }
}

</mosaic_0001>

<llo_original>
// kernel: tpu_custom_call.1
$region0: #{tpu_custom_call.1}
  #allocation0 [shape = 'u32[]', space=smem, size = 0x4, offset = 0x4, fixed_abs, tag = 'smem constant byte address 0x4 - core index']
  #allocation1 [shape = 'u32[72,128]{1,0:T(1,128)}', space=vmem, size = 0x9000, scoped, tag = 'internal scratch']
  %s0 = inlined_call_operand.vmem [shape: f32[2,32], index: 0, kind: input, shape index: {}]
  %s1 = inlined_call_operand.hbm [shape: f32[2,8,32], index: 1, kind: input, shape index: {}]
  %s2 = inlined_call_operand.vmem [shape: f32[2,1], index: 2, kind: input, shape index: {}]
  %s3 = inlined_call_operand.vmem [shape: f32[2,1], index: 3, kind: input, shape index: {}]
  %s4 = inlined_call_operand.hbm [shape: f32[32,32], index: 4, kind: input, shape index: {}]
  %s5 = inlined_call_operand.hbm [shape: f32[32,32], index: 5, kind: input, shape index: {}]
  %s6 = inlined_call_operand.hbm [shape: f32[32,32], index: 6, kind: input, shape index: {}]
  %s7 = inlined_call_operand.hbm [shape: f32[2,40], index: 7, kind: output, shape index: {}]
  %s8 = sld [smem:[#allocation0]]
  $region54: #{tpu_custom_call.1} parent=0
    _
  %s10 = ssub.s32 1, %s8
  %s11 = scalar_select 0, %s10, %s8
  $region1: #{tpu_custom_call.1} parent=0
    #allocation2 [shape = 'u8[8192]{0}', space=vmem, size = 0x2000, scoped, tag = 'input window, operand 1, single buffered']
    #allocation3 [shape = 's32[1]{0}', space=sflag, size = 0x4, scoped, tag = 'scoped memory for tpu_custom_call.1']
    #allocation4 [shape = 's32[1]{0}', space=sflag, size = 0x4, scoped, tag = 'scoped memory for tpu_custom_call.1']
    #allocation5 [shape = 'u8[16384]{0}', space=vmem, size = 0x4000, scoped, tag = 'input window, operand 4, single buffered']
    #allocation6 [shape = 's32[1]{0}', space=sflag, size = 0x4, scoped, tag = 'scoped memory for tpu_custom_call.1']
    #allocation7 [shape = 'u8[16384]{0}', space=vmem, size = 0x4000, scoped, tag = 'input window, operand 5, single buffered']
    #allocation8 [shape = 'u8[16384]{0}', space=vmem, size = 0x4000, scoped, tag = 'input window, operand 6, single buffered']
    #allocation9 [shape = 's32[1]{0}', space=sflag, size = 0x4, scoped, tag = 'scoped memory for tpu_custom_call.1']
    #allocation10 [shape = 'u8[1024]{0}', space=vmem, size = 0x400, scoped, tag = 'output window, operand 0, single buffered']
    %12 = vsyncpa [#allocation3], 0
    %13 = vsyncpa [#allocation6], 0
    %14 = vsyncpa [#allocation9], 0
    %15 = vsyncpa [#allocation4], 0
    // Predicated region
    $region2: #{tpu_custom_call.1} parent=1 // pred_check
      _
    $region3: #{tpu_custom_call.1} parent=1 // pred_check_branch
      %17 = sbr.rel (0) target = $region5
    $region4: #{tpu_custom_call.1} parent=1 // pred_region
      _
    $region5: #{tpu_custom_call.1} parent=1 // pred_fallthru
      _
    // Predicated region
    $region6: #{tpu_custom_call.1} parent=1 // pred_check
      _
    $region7: #{tpu_custom_call.1} parent=1 // pred_check_branch
      %19 = sbr.rel (0) target = $region9
    $region8: #{tpu_custom_call.1} parent=1 // pred_region
      %21 = vsyncadd [#allocation3], 0
      %s22 = sshll.u32 %s1, 4
      %s23 = int_to_ptr.hbm [resolvable:$true] %s22
      %s24 = sshll.u32 [#allocation2], 4
      %s25 = int_to_ptr.vmem [resolvable:$true] %s24
      %30 = dma.hbm_to_vmem [thread:$0]  %s23, 256, %s25, [#allocation3], 128, 128, 8
    $region9: #{tpu_custom_call.1} parent=1 // pred_fallthru
      _
    // Predicated region
    $region10: #{tpu_custom_call.1} parent=1 // pred_check
      _
    $region11: #{tpu_custom_call.1} parent=1 // pred_check_branch
      %32 = sbr.rel (0) target = $region13
    $region12: #{tpu_custom_call.1} parent=1 // pred_region
      _
    $region13: #{tpu_custom_call.1} parent=1 // pred_fallthru
      _
    // Predicated region
    $region14: #{tpu_custom_call.1} parent=1 // pred_check
      _
    $region15: #{tpu_custom_call.1} parent=1 // pred_check_branch
      %34 = sbr.rel (0) target = $region17
    $region16: #{tpu_custom_call.1} parent=1 // pred_region
      _
    $region17: #{tpu_custom_call.1} parent=1 // pred_fallthru
      _
    // Predicated region
    $region18: #{tpu_custom_call.1} parent=1 // pred_check
      _
    $region19: #{tpu_custom_call.1} parent=1 // pred_check_branch
      %36 = sbr.rel (0) target = $region21
    $region20: #{tpu_custom_call.1} parent=1 // pred_region
      %38 = vsyncadd [#allocation6], 0
      %s39 = sshll.u32 %s4, 4
      %s40 = int_to_ptr.hbm [resolvable:$true] %s39
      %s41 = sshll.u32 [#allocation5], 4
      %s42 = int_to_ptr.vmem [resolvable:$true] %s41
      %47 = dma.hbm_to_vmem [thread:$0]  %s40, 512, %s42, [#allocation6], 128, 128, 8
    $region21: #{tpu_custom_call.1} parent=1 // pred_fallthru
      _
    // Predicated region
    $region22: #{tpu_custom_call.1} parent=1 // pred_check
      _
    $region23: #{tpu_custom_call.1} parent=1 // pred_check_branch
      %49 = sbr.rel (0) target = $region25
    $region24: #{tpu_custom_call.1} parent=1 // pred_region
      %51 = vsyncadd [#allocation6], 0
      %s52 = sshll.u32 %s5, 4
      %s53 = int_to_ptr.hbm [resolvable:$true] %s52
      %s54 = sshll.u32 [#allocation7], 4
      %s55 = int_to_ptr.vmem [resolvable:$true] %s54
      %60 = dma.hbm_to_vmem [thread:$0]  %s53, 512, %s55, [#allocation6], 128, 128, 8
    $region25: #{tpu_custom_call.1} parent=1 // pred_fallthru
      _
    // Predicated region
    $region26: #{tpu_custom_call.1} parent=1 // pred_check
      _
    $region27: #{tpu_custom_call.1} parent=1 // pred_check_branch
      %62 = sbr.rel (0) target = $region29
    $region28: #{tpu_custom_call.1} parent=1 // pred_region
      %64 = vsyncadd [#allocation9], 0
      %s65 = sshll.u32 %s6, 4
      %s66 = int_to_ptr.hbm [resolvable:$true] %s65
      %s67 = sshll.u32 [#allocation8], 4
      %s68 = int_to_ptr.vmem [resolvable:$true] %s67
      %73 = dma.hbm_to_vmem [thread:$0]  %s66, 512, %s68, [#allocation9], 128, 128, 8
    $region29: #{tpu_custom_call.1} parent=1 // pred_fallthru
      _
    // Predicated region
    $region30: #{tpu_custom_call.1} parent=1 // pred_check
      _
    $region31: #{tpu_custom_call.1} parent=1 // pred_check_branch
      %75 = sbr.rel (0) target = $region33
    $region32: #{tpu_custom_call.1} parent=1 // pred_region
      %77 = dma.done [#allocation3], 256
    $region33: #{tpu_custom_call.1} parent=1 // pred_fallthru
      _
    // Predicated region
    $region34: #{tpu_custom_call.1} parent=1 // pred_check
      _
    $region35: #{tpu_custom_call.1} parent=1 // pred_check_branch
      %79 = sbr.rel (0) target = $region37
    $region36: #{tpu_custom_call.1} parent=1 // pred_region
      %81 = dma.done [#allocation6], 512
    $region37: #{tpu_custom_call.1} parent=1 // pred_fallthru
      _
    // Predicated region
    $region38: #{tpu_custom_call.1} parent=1 // pred_check
      _
    $region39: #{tpu_custom_call.1} parent=1 // pred_check_branch
      %83 = sbr.rel (0) target = $region41
    $region40: #{tpu_custom_call.1} parent=1 // pred_region
      %85 = dma.done [#allocation6], 512
    $region41: #{tpu_custom_call.1} parent=1 // pred_fallthru
      _
    // Predicated region
    $region42: #{tpu_custom_call.1} parent=1 // pred_check
      _
    $region43: #{tpu_custom_call.1} parent=1 // pred_check_branch
      %87 = sbr.rel (0) target = $region45
    $region44: #{tpu_custom_call.1} parent=1 // pred_region
      %89 = dma.done [#allocation9], 512
    $region45: #{tpu_custom_call.1} parent=1 // pred_fallthru
      _
    %v90 = vld [vmem:[%s0] sm:$0x3]
    %v91 = vld [vmem:[#allocation2] sm:$0xff]
    %v92 = vld [vmem:[#allocation2 + $0x8] sm:$0xff]
    %v93 = vld [vmem:[%s2] sm:$0x3]
    %v94 = vld [vmem:[%s3] sm:$0x3]
    %v95 = vld [vmem:[#allocation5] sm:$0xff]
    %v96 = vld [vmem:[#allocation5 + $0x8] sm:$0xff]
    %v97 = vld [vmem:[#allocation5 + $0x10] sm:$0xff]
    %v98 = vld [vmem:[#allocation5 + $0x18] sm:$0xff]
    %vm99 = vcmask 261120
    %v101 = vsel %vm99, %v90, 0
    %103 = vmatpush.msra.mxu0 0.0
    %104 = vmatpush.msra.mxu0 0.0
    %105 = vmatpush.msra.mxu0 0.0
    %106 = vmatpush.msra.mxu0 0.0
    %107 = vmatpush.msra.mxu0 0.0
    %108 = vmatpush.msra.mxu0 0.0
    %109 = vmatpush.msra.mxu0 0.0
    %110 = vmatpush.msra.mxu0 0.0
    %111 = vmatpush.msra.mxu0 0.0
    %112 = vmatpush.msra.mxu0 0.0
    %113 = vmatpush.msra.mxu0 0.0
    %114 = vmatpush.msra.mxu0 0.0
    %115 = vmatpush.msra.mxu0 %v98
    %116 = vmatpush.msra.mxu0 %v97
    %117 = vmatpush.msra.mxu0 %v96
    %118 = vmatpush.msra.mxu0 %v95
    %119 = vmatmul.f32.gmra.mxu0 %v101
    %v120 = vpop.f32.mrf.mxu0
    %v121 = vadd.f32 0.0, %v120
    %122 = vdwg.mxu0
    %v124 = vrot.slane %v121, 1
    %v125 = vperm.slane %v121, 0
    %v126 = vperm.slane %v124, 0
    %v129 = vmul.f32 %v125, %v91
    %v130 = vmul.f32 %v126, %v92
    %v131 = vsel %vm99, %v129, 0.0
    %132 = vadd.xlane.f32.xlu0 %v131
    %v133 = vpop.xlane.xlu0 %132
    %v134 = vsel %vm99, %v130, 0.0
    %135 = vadd.xlane.f32.xlu0 %v134
    %v136 = vpop.xlane.xlu0 %135
    %v137 = vrot.slane %v133, 4
    %v138 = vmax.f32 %v133, %v137
    %v139 = vrot.slane %v138, 2
    %v140 = vmax.f32 %v138, %v139
    %v141 = vrot.slane %v140, 1
    %v142 = vmax.f32 %v140, %v141
    %v143 = vrot.slane %v136, 4
    %v144 = vmax.f32 %v136, %v143
    %v145 = vrot.slane %v144, 2
    %v146 = vmax.f32 %v144, %v145
    %v147 = vrot.slane %v146, 1
    %v148 = vmax.f32 %v146, %v147
    %v149 = vsub.f32 %v133, %v142
    %v150 = vsub.f32 %v136, %v148
    %v151 = vmul.f32 %v149, 1.442695
    %v152 = vpow.pop %v151
    %v153 = vmul.f32 %v150, 1.442695
    %v154 = vpow.pop %v153
    %v155 = vrot.slane %v152, 4
    %v156 = vadd.f32 %v152, %v155
    %v157 = vrot.slane %v156, 2
    %v158 = vadd.f32 %v156, %v157
    %v159 = vrot.slane %v158, 1
    %v160 = vadd.f32 %v158, %v159
    %v161 = vrot.slane %v154, 4
    %v162 = vadd.f32 %v154, %v161
    %v163 = vrot.slane %v162, 2
    %v164 = vadd.f32 %v162, %v163
    %v165 = vrot.slane %v164, 1
    %v166 = vadd.f32 %v164, %v165
    %v167 = vrcp.pop %v160
    %v168 = vmul.f32 %v160, %v167
    %v169 = vsub.f32 1.0, %v168
    %v170 = vmul.f32 %v167, %v169
    %v171 = vadd.f32 %v167, %v170
    %vm172 = vweird.f32 %v160
    %vm173 = vweird.f32 %v167
    %vm174 = vmor %vm172, %vm173
    %v175 = vsel %vm174, %v167, %v171
    %v176 = vand.u32 2147483647, %v160
    %vm177 = vcmp.eq.f32.partialorder %v176, 8.507059e+37
    %v178 = vand.u32 %v160, 2147483648
    %v179 = vor.u32 1.1754944e-38, %v178
    %v180 = vsel %vm177, %v179, %v175
    %v181 = vmul.f32 %v152, %v180
    %v182 = vrcp.pop %v166
    %v183 = vmul.f32 %v166, %v182
    %v184 = vsub.f32 1.0, %v183
    %v185 = vmul.f32 %v182, %v184
    %v186 = vadd.f32 %v182, %v185
    %vm187 = vweird.f32 %v166
    %vm188 = vweird.f32 %v182
    %vm189 = vmor %vm187, %vm188
    %v190 = vsel %vm189, %v182, %v186
    %v191 = vand.u32 2147483647, %v166
    %vm192 = vcmp.eq.f32.partialorder %v191, 8.507059e+37
    %v193 = vand.u32 %v166, 2147483648
    %v194 = vor.u32 1.1754944e-38, %v193
    %v195 = vsel %vm192, %v194, %v190
    %v196 = vmul.f32 %v154, %v195
    %v197 = vmul.f32 %v181, %v91
    %v198 = vmul.f32 %v196, %v92
    %v199 = vlaneseq
    %v200 = vshrl.u32 %v199, 7
    %v201 = vcvt.s32.f32 %v200
    %v202 = vsub.f32 7.0, %v201
    %v204 = vrot.slane %v93, 1
    %v206 = vrot.slane %v94, 1
    %v208 = vsub.f32 0.0, %v94
    %v209 = vsub.f32 0.0, %v206
    %v212 = vperm.slane %v208, 0
    %v213 = vperm.slane %v209, 0
    %v216 = vmul.f32 %v212, %v202
    %v217 = vmul.f32 %v213, %v202
    %v218 = vmul.f32 %v216, 1.442695
    %v219 = vpow.pop %v218
    %v220 = vmul.f32 %v217, 1.442695
    %v221 = vpow.pop %v220
    %v222 = vperm.slane %v93, 0
    %v223 = vperm.slane %v204, 0
    %v226 = vmul.f32 %v222, %v219
    %v227 = vmul.f32 %v223, %v221
    %229 = vset.pattern.permute.xlu0 0
    %230 = vperm.xlu0 %229, %v226
    %v231 = vpop.permute.xlu0 %230
    %234 = vset.pattern.permute.xlu0 0
    %235 = vperm.xlu0 %234, %v227
    %v236 = vpop.permute.xlu0 %235
    %v238 = vmul.f32 %v231, %v197
    %v239 = vmul.f32 %v236, %v198
    %v240 = vmax.f32 %v238, 0.0
    %v241 = vmax.f32 %v239, 0.0
    %v242 = vadd.f32 %v240, %v197
    %v243 = vadd.f32 %v241, %v198
    %v244 = vsel %vm99, %v242, 0.0
    %v245 = vrot.slane %v244, 4
    %v246 = vadd.f32 %v244, %v245
    %v247 = vrot.slane %v246, 2
    %v248 = vadd.f32 %v246, %v247
    %v249 = vrot.slane %v248, 1
    %v250 = vadd.f32 %v248, %v249
    %v251 = vsel %vm99, %v243, 0.0
    %v252 = vrot.slane %v251, 4
    %v253 = vadd.f32 %v251, %v252
    %v254 = vrot.slane %v253, 2
    %v255 = vadd.f32 %v253, %v254
    %v256 = vrot.slane %v255, 1
    %v257 = vadd.f32 %v255, %v256
    %v258 = vld [vmem:[#allocation7] sm:$0xff]
    %v259 = vld [vmem:[#allocation7 + $0x8] sm:$0xff]
    %v260 = vld [vmem:[#allocation7 + $0x10] sm:$0xff]
    %v261 = vld [vmem:[#allocation7 + $0x18] sm:$0xff]
    %v262 = vld [vmem:[#allocation8] sm:$0xff]
    %v263 = vld [vmem:[#allocation8 + $0x8] sm:$0xff]
    %v264 = vld [vmem:[#allocation8 + $0x10] sm:$0xff]
    %v265 = vld [vmem:[#allocation8 + $0x18] sm:$0xff]
    %v266 = vsel %vm99, %v121, 0
    %268 = vmatpush.msra.mxu0 0.0
    %269 = vmatpush.msra.mxu0 0.0
    %270 = vmatpush.msra.mxu0 0.0
    %271 = vmatpush.msra.mxu0 0.0
    %272 = vmatpush.msra.mxu0 0.0
    %273 = vmatpush.msra.mxu0 0.0
    %274 = vmatpush.msra.mxu0 0.0
    %275 = vmatpush.msra.mxu0 0.0
    %276 = vmatpush.msra.mxu0 0.0
    %277 = vmatpush.msra.mxu0 0.0
    %278 = vmatpush.msra.mxu0 0.0
    %279 = vmatpush.msra.mxu0 0.0
    %280 = vmatpush.msra.mxu0 %v265
    %281 = vmatpush.msra.mxu0 %v264
    %282 = vmatpush.msra.mxu0 %v263
    %283 = vmatpush.msra.mxu0 %v262
    %284 = vmatmul.f32.gmra.mxu0 %v266
    %v285 = vpop.f32.mrf.mxu0
    %v286 = vadd.f32 0.0, %v285
    %287 = vdwg.mxu0
    %vm290 = vcmask 1041409
    %v291 = vsel %vm290, %v257, %v250
    %v292 = vsel %vm99, %v291, 0
    %294 = vmatpush.msra.mxu0 0.0
    %295 = vmatpush.msra.mxu0 0.0
    %296 = vmatpush.msra.mxu0 0.0
    %297 = vmatpush.msra.mxu0 0.0
    %298 = vmatpush.msra.mxu0 0.0
    %299 = vmatpush.msra.mxu0 0.0
    %300 = vmatpush.msra.mxu0 0.0
    %301 = vmatpush.msra.mxu0 0.0
    %302 = vmatpush.msra.mxu0 0.0
    %303 = vmatpush.msra.mxu0 0.0
    %304 = vmatpush.msra.mxu0 0.0
    %305 = vmatpush.msra.mxu0 0.0
    %306 = vmatpush.msra.mxu0 %v261
    %307 = vmatpush.msra.mxu0 %v260
    %308 = vmatpush.msra.mxu0 %v259
    %309 = vmatpush.msra.mxu0 %v258
    %310 = vmatmul.f32.gmra.mxu0 %v292
    %v311 = vpop.f32.mrf.mxu0
    %v312 = vadd.f32 %v286, %v311
    %313 = vdwg.mxu0
    %v314 = vtanh.pop %v312
    %vm315 = vcmask 254976
    %316 = vst.msk [vmem:[#allocation10] sm:$0x3] %vm315, %v314
    %v319 = vlaneseq
    %v320 = vand.u32 %v319, 127
    %v321 = vadd.s32 %v320, 4294967264
    %v322 = vperm.slane %v181, %v321
    %v323 = vperm.slane %v196, %v321
    %v324 = vsel %vm290, %v323, %v322
    %vm326 = vcmask 320768
    %327 = vst.msk [vmem:[#allocation10] sm:$0x3] %vm326, %v324
    // Predicated region
    $region46: #{tpu_custom_call.1} parent=1 // pred_check
      _
    $region47: #{tpu_custom_call.1} parent=1 // pred_check_branch
      %329 = sbr.rel (0) target = $region49
    $region48: #{tpu_custom_call.1} parent=1 // pred_region
      %331 = vsyncadd [#allocation4], 0
      %s333 = sshll.u32 [#allocation10], 4
      %s334 = int_to_ptr.vmem [resolvable:$true] %s333
      %s335 = sshll.u32 %s7, 4
      %s336 = int_to_ptr.hbm [resolvable:$true] %s335
      %338 = dma.vmem_to_hbm [thread:$0]  %s334, 32, %s336, [#allocation4]
    $region49: #{tpu_custom_call.1} parent=1 // pred_fallthru
      _
    // Predicated region
    $region50: #{tpu_custom_call.1} parent=1 // pred_check
      _
    $region51: #{tpu_custom_call.1} parent=1 // pred_check_branch
      %340 = sbr.rel (0) target = $region53
    $region52: #{tpu_custom_call.1} parent=1 // pred_region
      %342 = dma.done [#allocation4], 32
    $region53: #{tpu_custom_call.1} parent=1 // pred_fallthru
      _
    %343 = vsyncpa [#allocation3], 1
    %344 = vsyncpa [#allocation6], 1
    %345 = vsyncpa [#allocation9], 1
    %346 = vsyncpa [#allocation4], 1

</llo_original>
